<compile_context>
chip_gen: v6e
topology: v6e:2x2x1
jax: 0.10.0
libtpu: 0.0.40
codegen_flags: <defaults>
</compile_context>

<pallas_src>
import jax
import jax.numpy as jnp
from jax.experimental import pallas as pl
from jax.experimental.pallas import tpu as pltpu

HIDDEN = 256
OUT_PAD = 128  # lane-dense padded output width; q1 -> lane 0, q2 -> lane 1


def critic_kernel(ss_ref,
                  w14_ref, b14_ref,
                  w2_ref, b2_ref,
                  w5_ref, b5_ref,
                  w3_ref, w6_ref, b36_ref,
                  q_ref):
    cdt = w14_ref.dtype                      # MXU operand dtype (bf16 or f32)
    ss = ss_ref[...].astype(cdt)

    # Fused layer 1 of both heads: (tile_b, sa) @ (sa, 2*HIDDEN), f32 accumulate.
    a = jnp.dot(ss, w14_ref[...], preferred_element_type=jnp.float32)
    a = jnp.maximum(a + b14_ref[...], 0.0)
    h = a[:, :HIDDEN].astype(cdt)            # Q1 head activations
    g = a[:, HIDDEN:].astype(cdt)            # Q2 head activations

    # Layer 2 (per head), f32 bias + ReLU.
    h = jnp.maximum(
        jnp.dot(h, w2_ref[...], preferred_element_type=jnp.float32) + b2_ref[...],
        0.0)
    g = jnp.maximum(
        jnp.dot(g, w5_ref[...], preferred_element_type=jnp.float32) + b5_ref[...],
        0.0)

    # Merged final projections into a single lane-dense padded slab:
    #   q1 in column 0 (w3 padded), q2 in column 1 (w6 padded).
    q = (jnp.dot(h.astype(cdt), w3_ref[...], preferred_element_type=jnp.float32)
         + jnp.dot(g.astype(cdt), w6_ref[...], preferred_element_type=jnp.float32)
         + b36_ref[...])
    q_ref[...] = q.astype(q_ref.dtype)


def _cdiv(a, b):
    return (a + b - 1) // b


def _round_up(x, m):
    return _cdiv(x, m) * m


def _choose_tile_b(B, tile_b_max, min_tiles):
    """Tile rows: multiple of 8, <= tile_b_max, and >= min_tiles grid steps
    whenever B allows it (keeps both v7x TensorCores busy)."""
    n_tiles = max(min_tiles, _cdiv(B, tile_b_max))
    return _round_up(_cdiv(B, n_tiles), 8)


def critic_forward(state, next_state, packed, *, tile_b_max=1024, min_tiles=2):
    """Pallas equivalent of Critic.forward(state, next_state) -> (q1, q2)."""
    B, state_dim = state.shape
    sa_dim = 2 * state_dim
    (w14, b14, w2, b2, w5, b5, w3p, w6p, b36) = packed

    # Concat once in the wrapper -> single fused layer-1 matmul in the kernel.
    ss = jnp.concatenate([state, next_state], axis=1)

    tile_b = _choose_tile_b(B, tile_b_max, min_tiles)
    grid = (_cdiv(B, tile_b),)  # ragged last block handled by Pallas

    batch_spec = pl.BlockSpec((tile_b, sa_dim), lambda i: (i, 0))
    out_spec = pl.BlockSpec((tile_b, OUT_PAD), lambda i: (i, 0))

    def const_spec(arr):  # weights/biases: fetched once, VMEM-resident
        return pl.BlockSpec(arr.shape, lambda i: (0, 0))

    flops = (2 * B * sa_dim * (2 * HIDDEN)          # fused layer 1 (both heads)
             + 2 * 2 * B * HIDDEN * HIDDEN          # layers 2 & 5
             + 2 * 2 * B * HIDDEN * OUT_PAD)        # merged padded projections
    bytes_accessed = (int(ss.size) * ss.dtype.itemsize
                      + sum(int(p.size) * p.dtype.itemsize for p in packed)
                      + B * OUT_PAD * 4)

    q_pad = pl.pallas_call(
        critic_kernel,
        out_shape=jax.ShapeDtypeStruct((B, OUT_PAD), jnp.float32),
        grid=grid,
        in_specs=[batch_spec,
                  const_spec(w14), const_spec(b14),
                  const_spec(w2), const_spec(b2),
                  const_spec(w5), const_spec(b5),
                  const_spec(w3p), const_spec(w6p), const_spec(b36)],
        out_specs=out_spec,
        compiler_params=pltpu.CompilerParams(
            dimension_semantics=("parallel",)),
        cost_estimate=pl.CostEstimate(
            flops=flops, transcendentals=0, bytes_accessed=bytes_accessed),
    )(ss, w14, b14, w2, b2, w5, b5, w3p, w6p, b36)

    # q1 lives in column 0, q2 in column 1 of the padded slab.
    return q_pad[:, 0:1], q_pad[:, 1:2]


def init_params(key, state_dim, hidden=HIDDEN):
    """Raw PyTorch-nn.Linear-style params; weights stored (in, out)."""
    sa_dim = 2 * state_dim
    ks = jax.random.split(key, 12)

    def uinit(k, shape, fan_in):
        bound = 1.0 / (float(fan_in) ** 0.5)
        return jax.random.uniform(k, shape, jnp.float32, -bound, bound)

    dims = [(sa_dim, hidden), (hidden, hidden), (hidden, 1),
            (sa_dim, hidden), (hidden, hidden), (hidden, 1)]
    raw = {}
    for n, (din, dout) in enumerate(dims, start=1):
        raw[f"w{n}"] = uinit(ks[2 * n - 2], (din, dout), din)
        raw[f"b{n}"] = uinit(ks[2 * n - 1], (1, dout), din)
    return raw


def pack_params(raw, compute_dtype=jnp.bfloat16):
    """Kernel-layout params: fused W1||W4, merged padded final projection.
    Weights cast to compute_dtype (MXU operands); biases kept f32."""
    w14 = jnp.concatenate([raw["w1"], raw["w4"]], axis=1).astype(compute_dtype)
    b14 = jnp.concatenate([raw["b1"], raw["b4"]], axis=1).astype(jnp.float32)
    w2 = raw["w2"].astype(compute_dtype)
    b2 = raw["b2"].astype(jnp.float32)
    w5 = raw["w5"].astype(compute_dtype)
    b5 = raw["b5"].astype(jnp.float32)
    # q1 column -> lane 0, q2 column -> lane 1 of the shared padded output slab.
    w3p = jnp.pad(raw["w3"], ((0, 0), (0, OUT_PAD - 1))).astype(compute_dtype)
    w6p = jnp.pad(raw["w6"], ((0, 0), (1, OUT_PAD - 2))).astype(compute_dtype)
    b36 = (jnp.pad(raw["b3"], ((0, 0), (0, OUT_PAD - 1)))
           + jnp.pad(raw["b6"], ((0, 0), (1, OUT_PAD - 2)))).astype(jnp.float32)
    return (w14, b14, w2, b2, w5, b5, w3p, w6p, b36)


def critic_ref(state, next_state, raw):
    """Plain-JAX reference (matches the PyTorch Critic.forward)."""
    ss = jnp.concatenate([state, next_state], axis=1)
    h = jnp.maximum(ss @ raw["w1"] + raw["b1"], 0.0)
    h = jnp.maximum(h @ raw["w2"] + raw["b2"], 0.0)
    q1 = h @ raw["w3"] + raw["b3"]
    g = jnp.maximum(ss @ raw["w4"] + raw["b4"], 0.0)
    g = jnp.maximum(g @ raw["w5"] + raw["b5"], 0.0)
    q2 = g @ raw["w6"] + raw["b6"]
    return q1, q2


if __name__ == "__main__":
    B, STATE_DIM = 8, 12

    key = jax.random.PRNGKey(0)
    k_s, k_ns, k_p = jax.random.split(key, 3)

    state = jax.random.normal(k_s, (B, STATE_DIM), jnp.float32)
    next_state = jax.random.normal(k_ns, (B, STATE_DIM), jnp.float32)
    raw = init_params(k_p, STATE_DIM)
    q1_ref, q2_ref = critic_ref(state, next_state, raw)

    # --- exact-parity check: f32 compute path ---
    packed_f32 = pack_params(raw, compute_dtype=jnp.float32)
    q1, q2 = critic_forward(state, next_state, packed_f32)
    q1 = jax.block_until_ready(q1)
    q2 = jax.block_until_ready(q2)
    assert q1.shape == (B, 1) and q2.shape == (B, 1)
    assert jnp.allclose(q1, q1_ref, atol=1e-4, rtol=1e-4)
    assert jnp.allclose(q2, q2_ref, atol=1e-4, rtol=1e-4)

    # --- perf path: bf16 MXU operands, f32 accumulation (looser tolerance) ---
    packed_bf16 = pack_params(raw, compute_dtype=jnp.bfloat16)
    q1b, q2b = critic_forward(state, next_state, packed_bf16)
    q1b = jax.block_until_ready(q1b)
    q2b = jax.block_until_ready(q2b)
    assert jnp.allclose(q1b, q1_ref, atol=3e-2, rtol=3e-2)
    assert jnp.allclose(q2b, q2_ref, atol=3e-2, rtol=3e-2)

    # --- ragged batch (non-divisible last block) check ---
    Br = 20
    state_r = jax.random.normal(jax.random.PRNGKey(1), (Br, STATE_DIM), jnp.float32)
    next_r = jax.random.normal(jax.random.PRNGKey(2), (Br, STATE_DIM), jnp.float32)
    q1r, q2r = critic_forward(state_r, next_r, packed_f32)
    q1r = jax.block_until_ready(q1r)
    q2r = jax.block_until_ready(q2r)
    q1r_ref, q2r_ref = critic_ref(state_r, next_r, raw)
    assert q1r.shape == (Br, 1) and q2r.shape == (Br, 1)
    assert jnp.allclose(q1r, q1r_ref, atol=1e-4, rtol=1e-4)
    assert jnp.allclose(q2r, q2r_ref, atol=1e-4, rtol=1e-4)

    print("KERNEL_OK")
</pallas_src>

<mosaic_0001>
module attributes {stable_mosaic.version = 11 : i64} {
  func.func @critic_kernel(%arg0: i32, %arg1: memref<8x24xf32, #tpu.memory_space<vmem>>, %arg2: memref<24x512xf32, #tpu.memory_space<vmem>>, %arg3: memref<1x512xf32, #tpu.memory_space<vmem>>, %arg4: memref<256x256xf32, #tpu.memory_space<vmem>>, %arg5: memref<1x256xf32, #tpu.memory_space<vmem>>, %arg6: memref<256x256xf32, #tpu.memory_space<vmem>>, %arg7: memref<1x256xf32, #tpu.memory_space<vmem>>, %arg8: memref<256x128xf32, #tpu.memory_space<vmem>>, %arg9: memref<256x128xf32, #tpu.memory_space<vmem>>, %arg10: memref<1x128xf32, #tpu.memory_space<vmem>>, %arg11: memref<8x128xf32, #tpu.memory_space<vmem>>) attributes {dimension_semantics = [#tpu.dimension_semantics<parallel>], iteration_bounds = array<i64: 1>, scalar_prefetch = 0 : i64, scratch_operands = 0 : i64, tpu.core_type = #tpu.core_type<tc>, window_params = [{transform_indices = @transform_0, window_bounds = array<i64: 8, 24>}, {pipeline_mode = #tpu.pipeline_mode<synchronous>, transform_indices = @transform_1, window_bounds = array<i64: 24, 512>}, {pipeline_mode = #tpu.pipeline_mode<synchronous>, transform_indices = @transform_2, window_bounds = array<i64: 1, 512>}, {pipeline_mode = #tpu.pipeline_mode<synchronous>, transform_indices = @transform_3, window_bounds = array<i64: 256, 256>}, {pipeline_mode = #tpu.pipeline_mode<synchronous>, transform_indices = @transform_4, window_bounds = array<i64: 1, 256>}, {pipeline_mode = #tpu.pipeline_mode<synchronous>, transform_indices = @transform_5, window_bounds = array<i64: 256, 256>}, {pipeline_mode = #tpu.pipeline_mode<synchronous>, transform_indices = @transform_6, window_bounds = array<i64: 1, 256>}, {pipeline_mode = #tpu.pipeline_mode<synchronous>, transform_indices = @transform_7, window_bounds = array<i64: 256, 128>}, {pipeline_mode = #tpu.pipeline_mode<synchronous>, transform_indices = @transform_8, window_bounds = array<i64: 256, 128>}, {pipeline_mode = #tpu.pipeline_mode<synchronous>, transform_indices = @transform_9, window_bounds = array<i64: 1, 128>}, {transform_indices = @transform_10, window_bounds = array<i64: 8, 128>}]} {
    %c0 = arith.constant 0 : index
    %c0_0 = arith.constant 0 : index
    %0 = vector.load %arg1[%c0, %c0_0] : memref<8x24xf32, #tpu.memory_space<vmem>>, vector<8x24xf32>
    %c0_1 = arith.constant 0 : index
    %c0_2 = arith.constant 0 : index
    %1 = vector.load %arg2[%c0_1, %c0_2] : memref<24x512xf32, #tpu.memory_space<vmem>>, vector<24x512xf32>
    %cst = arith.constant dense<0.000000e+00> : vector<8x512xf32>
    %2 = tpu.matmul %0, %1, %cst {dimension_numbers = #tpu.dot_dimension_numbers<[1], [0], [0], [1], [0, 0, 1, 1], [], []>} : vector<8x24xf32>, vector<24x512xf32>, vector<8x512xf32> -> vector<8x512xf32>
    %c0_3 = arith.constant 0 : index
    %c0_4 = arith.constant 0 : index
    %3 = vector.load %arg3[%c0_3, %c0_4] : memref<1x512xf32, #tpu.memory_space<vmem>>, vector<1x512xf32>
    %4 = vector.broadcast %3 : vector<1x512xf32> to vector<8x512xf32>
    %5 = arith.addf %2, %4 : vector<8x512xf32>
    %cst_5 = arith.constant 0.000000e+00 : f32
    %6 = vector.broadcast %cst_5 : f32 to vector<8x512xf32>
    %7 = arith.maximumf %5, %6 : vector<8x512xf32>
    %8 = vector.extract_strided_slice %7 {offsets = [0, 0], sizes = [8, 256], strides = [1, 1]} : vector<8x512xf32> to vector<8x256xf32>
    %9 = vector.extract_strided_slice %7 {offsets = [0, 256], sizes = [8, 256], strides = [1, 1]} : vector<8x512xf32> to vector<8x256xf32>
    %c0_6 = arith.constant 0 : index
    %c0_7 = arith.constant 0 : index
    %10 = vector.load %arg4[%c0_6, %c0_7] : memref<256x256xf32, #tpu.memory_space<vmem>>, vector<256x256xf32>
    %cst_8 = arith.constant dense<0.000000e+00> : vector<8x256xf32>
    %11 = tpu.matmul %8, %10, %cst_8 {dimension_numbers = #tpu.dot_dimension_numbers<[1], [0], [0], [1], [0, 0, 1, 1], [], []>} : vector<8x256xf32>, vector<256x256xf32>, vector<8x256xf32> -> vector<8x256xf32>
    %c0_9 = arith.constant 0 : index
    %c0_10 = arith.constant 0 : index
    %12 = vector.load %arg5[%c0_9, %c0_10] : memref<1x256xf32, #tpu.memory_space<vmem>>, vector<1x256xf32>
    %13 = vector.broadcast %12 : vector<1x256xf32> to vector<8x256xf32>
    %14 = arith.addf %11, %13 : vector<8x256xf32>
    %cst_11 = arith.constant 0.000000e+00 : f32
    %15 = vector.broadcast %cst_11 : f32 to vector<8x256xf32>
    %16 = arith.maximumf %14, %15 : vector<8x256xf32>
    %c0_12 = arith.constant 0 : index
    %c0_13 = arith.constant 0 : index
    %17 = vector.load %arg6[%c0_12, %c0_13] : memref<256x256xf32, #tpu.memory_space<vmem>>, vector<256x256xf32>
    %cst_14 = arith.constant dense<0.000000e+00> : vector<8x256xf32>
    %18 = tpu.matmul %9, %17, %cst_14 {dimension_numbers = #tpu.dot_dimension_numbers<[1], [0], [0], [1], [0, 0, 1, 1], [], []>} : vector<8x256xf32>, vector<256x256xf32>, vector<8x256xf32> -> vector<8x256xf32>
    %c0_15 = arith.constant 0 : index
    %c0_16 = arith.constant 0 : index
    %19 = vector.load %arg7[%c0_15, %c0_16] : memref<1x256xf32, #tpu.memory_space<vmem>>, vector<1x256xf32>
    %20 = vector.broadcast %19 : vector<1x256xf32> to vector<8x256xf32>
    %21 = arith.addf %18, %20 : vector<8x256xf32>
    %cst_17 = arith.constant 0.000000e+00 : f32
    %22 = vector.broadcast %cst_17 : f32 to vector<8x256xf32>
    %23 = arith.maximumf %21, %22 : vector<8x256xf32>
    %c0_18 = arith.constant 0 : index
    %c0_19 = arith.constant 0 : index
    %24 = vector.load %arg8[%c0_18, %c0_19] : memref<256x128xf32, #tpu.memory_space<vmem>>, vector<256x128xf32>
    %cst_20 = arith.constant dense<0.000000e+00> : vector<8x128xf32>
    %25 = tpu.matmul %16, %24, %cst_20 {dimension_numbers = #tpu.dot_dimension_numbers<[1], [0], [0], [1], [0, 0, 1, 1], [], []>} : vector<8x256xf32>, vector<256x128xf32>, vector<8x128xf32> -> vector<8x128xf32>
    %c0_21 = arith.constant 0 : index
    %c0_22 = arith.constant 0 : index
    %26 = vector.load %arg9[%c0_21, %c0_22] : memref<256x128xf32, #tpu.memory_space<vmem>>, vector<256x128xf32>
    %cst_23 = arith.constant dense<0.000000e+00> : vector<8x128xf32>
    %27 = tpu.matmul %23, %26, %cst_23 {dimension_numbers = #tpu.dot_dimension_numbers<[1], [0], [0], [1], [0, 0, 1, 1], [], []>} : vector<8x256xf32>, vector<256x128xf32>, vector<8x128xf32> -> vector<8x128xf32>
    %28 = arith.addf %25, %27 : vector<8x128xf32>
    %c0_24 = arith.constant 0 : index
    %c0_25 = arith.constant 0 : index
    %29 = vector.load %arg10[%c0_24, %c0_25] : memref<1x128xf32, #tpu.memory_space<vmem>>, vector<1x128xf32>
    %30 = vector.broadcast %29 : vector<1x128xf32> to vector<8x128xf32>
    %31 = arith.addf %28, %30 : vector<8x128xf32>
    %c0_26 = arith.constant 0 : index
    %c0_27 = arith.constant 0 : index
    %32 = vector.load %arg11[%c0_26, %c0_27] : memref<8x128xf32, #tpu.memory_space<vmem>>, vector<8x128xf32>
    tpu.vector_store %arg11[%c0_26, %c0_27], %31 {strides = array<i32>} : memref<8x128xf32, #tpu.memory_space<vmem>>, vector<8x128xf32>,
    return
  }
  func.func @transform_0(%arg0: i32) -> (i32, i32) {
    %c0_i32 = arith.constant 0 : i32
    %c0_i32_0 = arith.constant 0 : i32
    return %arg0, %c0_i32 : i32, i32
  }
  func.func @transform_1(%arg0: i32) -> (i32, i32) {
    %c0_i32 = arith.constant 0 : i32
    %c0_i32_0 = arith.constant 0 : i32
    %c0_i32_1 = arith.constant 0 : i32
    return %c0_i32, %c0_i32_0 : i32, i32
  }
  func.func @transform_2(%arg0: i32) -> (i32, i32) {
    %c0_i32 = arith.constant 0 : i32
    %c0_i32_0 = arith.constant 0 : i32
    %c0_i32_1 = arith.constant 0 : i32
    return %c0_i32, %c0_i32_0 : i32, i32
  }
  func.func @transform_3(%arg0: i32) -> (i32, i32) {
    %c0_i32 = arith.constant 0 : i32
    %c0_i32_0 = arith.constant 0 : i32
    %c0_i32_1 = arith.constant 0 : i32
    return %c0_i32, %c0_i32_0 : i32, i32
  }
  func.func @transform_4(%arg0: i32) -> (i32, i32) {
    %c0_i32 = arith.constant 0 : i32
    %c0_i32_0 = arith.constant 0 : i32
    %c0_i32_1 = arith.constant 0 : i32
    return %c0_i32, %c0_i32_0 : i32, i32
  }
  func.func @transform_5(%arg0: i32) -> (i32, i32) {
    %c0_i32 = arith.constant 0 : i32
    %c0_i32_0 = arith.constant 0 : i32
    %c0_i32_1 = arith.constant 0 : i32
    return %c0_i32, %c0_i32_0 : i32, i32
  }
  func.func @transform_6(%arg0: i32) -> (i32, i32) {
    %c0_i32 = arith.constant 0 : i32
    %c0_i32_0 = arith.constant 0 : i32
    %c0_i32_1 = arith.constant 0 : i32
    return %c0_i32, %c0_i32_0 : i32, i32
  }
  func.func @transform_7(%arg0: i32) -> (i32, i32) {
    %c0_i32 = arith.constant 0 : i32
    %c0_i32_0 = arith.constant 0 : i32
    %c0_i32_1 = arith.constant 0 : i32
    return %c0_i32, %c0_i32_0 : i32, i32
  }
  func.func @transform_8(%arg0: i32) -> (i32, i32) {
    %c0_i32 = arith.constant 0 : i32
    %c0_i32_0 = arith.constant 0 : i32
    %c0_i32_1 = arith.constant 0 : i32
    return %c0_i32, %c0_i32_0 : i32, i32
  }
  func.func @transform_9(%arg0: i32) -> (i32, i32) {
    %c0_i32 = arith.constant 0 : i32
    %c0_i32_0 = arith.constant 0 : i32
    %c0_i32_1 = arith.constant 0 : i32
    return %c0_i32, %c0_i32_0 : i32, i32
  }
  func.func @transform_10(%arg0: i32) -> (i32, i32) {
    %c0_i32 = arith.constant 0 : i32
    %c0_i32_0 = arith.constant 0 : i32
    return %arg0, %c0_i32 : i32, i32
  }
}

</mosaic_0001>

<llo_original>
// kernel: tpu_custom_call.1
$region0: #{tpu_custom_call.1}
  #allocation0 [shape = 'u32[]', space=smem, size = 0x4, offset = 0x4, fixed_abs, tag = 'smem constant byte address 0x4 - core index']
  #allocation1 [shape = 'u32[144,128]{1,0:T(1,128)}', space=vmem, size = 0x12000, scoped, tag = 'internal scratch']
  %s0 = inlined_call_operand.hbm [shape: f32[8,24], index: 0, kind: input, shape index: {}]
  %s1 = inlined_call_operand.hbm [shape: f32[24,512], index: 1, kind: input, shape index: {}]
  %s2 = inlined_call_operand.hbm [shape: f32[1,512], index: 2, kind: input, shape index: {}]
  %s3 = inlined_call_operand.hbm [shape: f32[256,256], index: 3, kind: input, shape index: {}]
  %s4 = inlined_call_operand.vmem [shape: f32[1,256], index: 4, kind: input, shape index: {}]
  %s5 = inlined_call_operand.hbm [shape: f32[256,256], index: 5, kind: input, shape index: {}]
  %s6 = inlined_call_operand.vmem [shape: f32[1,256], index: 6, kind: input, shape index: {}]
  %s7 = inlined_call_operand.hbm [shape: f32[256,128], index: 7, kind: input, shape index: {}]
  %s8 = inlined_call_operand.hbm [shape: f32[256,128], index: 8, kind: input, shape index: {}]
  %s9 = inlined_call_operand.vmem [shape: f32[1,128], index: 9, kind: input, shape index: {}]
  %s10 = inlined_call_operand.hbm [shape: f32[8,128], index: 10, kind: output, shape index: {}]
  %s11 = sld [smem:[#allocation0]]
  $region78: #{tpu_custom_call.1} parent=0
    _
  %s13 = ssub.s32 1, %s11
  %s14 = scalar_select 0, %s13, %s11
  $region1: #{tpu_custom_call.1} parent=0
    #allocation2 [shape = 'u8[4096]{0}', space=vmem, size = 0x1000, scoped, tag = 'input window, operand 0, single buffered']
    #allocation3 [shape = 's32[1]{0}', space=sflag, size = 0x4, scoped, tag = 'scoped memory for tpu_custom_call.1']
    #allocation4 [shape = 's32[1]{0}', space=sflag, size = 0x4, scoped, tag = 'scoped memory for tpu_custom_call.1']
    #allocation5 [shape = 'u8[49152]{0}', space=vmem, size = 0xc000, scoped, tag = 'input window, operand 1, single buffered']
    #allocation6 [shape = 's32[1]{0}', space=sflag, size = 0x4, scoped, tag = 'scoped memory for tpu_custom_call.1']
    #allocation7 [shape = 'u8[2048]{0}', space=vmem, size = 0x800, scoped, tag = 'input window, operand 2, single buffered']
    #allocation8 [shape = 'u8[262144]{0}', space=vmem, size = 0x40000, scoped, tag = 'input window, operand 3, single buffered']
    #allocation9 [shape = 's32[1]{0}', space=sflag, size = 0x4, scoped, tag = 'scoped memory for tpu_custom_call.1']
    #allocation10 [shape = 'u8[262144]{0}', space=vmem, size = 0x40000, scoped, tag = 'input window, operand 5, single buffered']
    #allocation11 [shape = 'u8[131072]{0}', space=vmem, size = 0x20000, scoped, tag = 'input window, operand 7, single buffered']
    #allocation12 [shape = 's32[1]{0}', space=sflag, size = 0x4, scoped, tag = 'scoped memory for tpu_custom_call.1']
    #allocation13 [shape = 'u8[131072]{0}', space=vmem, size = 0x20000, scoped, tag = 'input window, operand 8, single buffered']
    #allocation14 [shape = 'u8[4096]{0}', space=vmem, size = 0x1000, scoped, tag = 'output window, operand 0, single buffered']
    %15 = vsyncpa [#allocation3], 0
    %16 = vsyncpa [#allocation6], 0
    %17 = vsyncpa [#allocation9], 0
    %18 = vsyncpa [#allocation12], 0
    %19 = vsyncpa [#allocation4], 0
    // Predicated region
    $region2: #{tpu_custom_call.1} parent=1 // pred_check
      _
    $region3: #{tpu_custom_call.1} parent=1 // pred_check_branch
      %21 = sbr.rel (0) target = $region5
    $region4: #{tpu_custom_call.1} parent=1 // pred_region
      %s23 = ssub.s32 128, 128
      %24 = vsyncadd [#allocation3], %s23
      %s26 = sshll.u32 [#allocation2], 4
      %s27 = int_to_ptr.vmem [resolvable:$true] %s26
      %29 = dma.hbm_to_vmem [thread:$0]  %s0, 128, %s27, [#allocation3]
    $region5: #{tpu_custom_call.1} parent=1 // pred_fallthru
      _
    // Predicated region
    $region6: #{tpu_custom_call.1} parent=1 // pred_check
      _
    $region7: #{tpu_custom_call.1} parent=1 // pred_check_branch
      %31 = sbr.rel (0) target = $region9
    $region8: #{tpu_custom_call.1} parent=1 // pred_region
      %s33 = ssub.s32 1536, 1536
      %34 = vsyncadd [#allocation6], %s33
      %s35 = sshll.u32 [#allocation5], 4
      %s36 = int_to_ptr.vmem [resolvable:$true] %s35
      %41 = dma.hbm_to_vmem [thread:$0]  %s1, 1536, %s36, [#allocation6], 512, 512, 32
    $region9: #{tpu_custom_call.1} parent=1 // pred_fallthru
      _
    // Predicated region
    $region10: #{tpu_custom_call.1} parent=1 // pred_check
      _
    $region11: #{tpu_custom_call.1} parent=1 // pred_check_branch
      %43 = sbr.rel (0) target = $region13
    $region12: #{tpu_custom_call.1} parent=1 // pred_region
      %s45 = ssub.s32 64, 64
      %46 = vsyncadd [#allocation6], %s45
      %s48 = sshll.u32 [#allocation7], 4
      %s49 = int_to_ptr.vmem [resolvable:$true] %s48
      %51 = dma.hbm_to_vmem [thread:$0]  %s2, 64, %s49, [#allocation6]
    $region13: #{tpu_custom_call.1} parent=1 // pred_fallthru
      _
    // Predicated region
    $region14: #{tpu_custom_call.1} parent=1 // pred_check
      _
    $region15: #{tpu_custom_call.1} parent=1 // pred_check_branch
      %53 = sbr.rel (0) target = $region17
    $region16: #{tpu_custom_call.1} parent=1 // pred_region
      %s55 = ssub.s32 8192, 8192
      %56 = vsyncadd [#allocation9], %s55
      %s57 = sshll.u32 [#allocation8], 4
      %s58 = int_to_ptr.vmem [resolvable:$true] %s57
      %63 = dma.hbm_to_vmem [thread:$0]  %s3, 8192, %s58, [#allocation9], 256, 256, 16
    $region17: #{tpu_custom_call.1} parent=1 // pred_fallthru
      _
    // Predicated region
    $region18: #{tpu_custom_call.1} parent=1 // pred_check
      _
    $region19: #{tpu_custom_call.1} parent=1 // pred_check_branch
      %65 = sbr.rel (0) target = $region21
    $region20: #{tpu_custom_call.1} parent=1 // pred_region
      _
    $region21: #{tpu_custom_call.1} parent=1 // pred_fallthru
      _
    // Predicated region
    $region22: #{tpu_custom_call.1} parent=1 // pred_check
      _
    $region23: #{tpu_custom_call.1} parent=1 // pred_check_branch
      %67 = sbr.rel (0) target = $region25
    $region24: #{tpu_custom_call.1} parent=1 // pred_region
      %s69 = ssub.s32 8192, 8192
      %70 = vsyncadd [#allocation9], %s69
      %s71 = sshll.u32 [#allocation10], 4
      %s72 = int_to_ptr.vmem [resolvable:$true] %s71
      %77 = dma.hbm_to_vmem [thread:$0]  %s5, 8192, %s72, [#allocation9], 256, 256, 16
    $region25: #{tpu_custom_call.1} parent=1 // pred_fallthru
      _
    // Predicated region
    $region26: #{tpu_custom_call.1} parent=1 // pred_check
      _
    $region27: #{tpu_custom_call.1} parent=1 // pred_check_branch
      %79 = sbr.rel (0) target = $region29
    $region28: #{tpu_custom_call.1} parent=1 // pred_region
      _
    $region29: #{tpu_custom_call.1} parent=1 // pred_fallthru
      _
    // Predicated region
    $region30: #{tpu_custom_call.1} parent=1 // pred_check
      _
    $region31: #{tpu_custom_call.1} parent=1 // pred_check_branch
      %81 = sbr.rel (0) target = $region33
    $region32: #{tpu_custom_call.1} parent=1 // pred_region
      %s83 = ssub.s32 4096, 4096
      %84 = vsyncadd [#allocation12], %s83
      %s85 = sshll.u32 [#allocation11], 4
      %s86 = int_to_ptr.vmem [resolvable:$true] %s85
      %91 = dma.hbm_to_vmem [thread:$0]  %s7, 4096, %s86, [#allocation12], 128, 128, 8
    $region33: #{tpu_custom_call.1} parent=1 // pred_fallthru
      _
    // Predicated region
    $region34: #{tpu_custom_call.1} parent=1 // pred_check
      _
    $region35: #{tpu_custom_call.1} parent=1 // pred_check_branch
      %93 = sbr.rel (0) target = $region37
    $region36: #{tpu_custom_call.1} parent=1 // pred_region
      %s95 = ssub.s32 4096, 4096
      %96 = vsyncadd [#allocation12], %s95
      %s97 = sshll.u32 [#allocation13], 4
      %s98 = int_to_ptr.vmem [resolvable:$true] %s97
      %103 = dma.hbm_to_vmem [thread:$0]  %s8, 4096, %s98, [#allocation12], 128, 128, 8
    $region37: #{tpu_custom_call.1} parent=1 // pred_fallthru
      _
    // Predicated region
    $region38: #{tpu_custom_call.1} parent=1 // pred_check
      _
    $region39: #{tpu_custom_call.1} parent=1 // pred_check_branch
      %105 = sbr.rel (0) target = $region41
    $region40: #{tpu_custom_call.1} parent=1 // pred_region
      _
    $region41: #{tpu_custom_call.1} parent=1 // pred_fallthru
      _
    // Predicated region
    $region42: #{tpu_custom_call.1} parent=1 // pred_check
      _
    $region43: #{tpu_custom_call.1} parent=1 // pred_check_branch
      %107 = sbr.rel (0) target = $region45
    $region44: #{tpu_custom_call.1} parent=1 // pred_region
      %108 = dma.done [#allocation3], 128
    $region45: #{tpu_custom_call.1} parent=1 // pred_fallthru
      _
    // Predicated region
    $region46: #{tpu_custom_call.1} parent=1 // pred_check
      _
    $region47: #{tpu_custom_call.1} parent=1 // pred_check_branch
      %110 = sbr.rel (0) target = $region49
    $region48: #{tpu_custom_call.1} parent=1 // pred_region
      %111 = dma.done [#allocation6], 1536
    $region49: #{tpu_custom_call.1} parent=1 // pred_fallthru
      _
    // Predicated region
    $region50: #{tpu_custom_call.1} parent=1 // pred_check
      _
    $region51: #{tpu_custom_call.1} parent=1 // pred_check_branch
      %113 = sbr.rel (0) target = $region53
    $region52: #{tpu_custom_call.1} parent=1 // pred_region
      %114 = dma.done [#allocation6], 64
    $region53: #{tpu_custom_call.1} parent=1 // pred_fallthru
      _
    // Predicated region
    $region54: #{tpu_custom_call.1} parent=1 // pred_check
      _
    $region55: #{tpu_custom_call.1} parent=1 // pred_check_branch
      %116 = sbr.rel (0) target = $region57
    $region56: #{tpu_custom_call.1} parent=1 // pred_region
      %117 = dma.done [#allocation9], 8192
    $region57: #{tpu_custom_call.1} parent=1 // pred_fallthru
      _
    // Predicated region
    $region58: #{tpu_custom_call.1} parent=1 // pred_check
      _
    $region59: #{tpu_custom_call.1} parent=1 // pred_check_branch
      %119 = sbr.rel (0) target = $region61
    $region60: #{tpu_custom_call.1} parent=1 // pred_region
      %120 = dma.done [#allocation9], 8192
    $region61: #{tpu_custom_call.1} parent=1 // pred_fallthru
      _
    // Predicated region
    $region62: #{tpu_custom_call.1} parent=1 // pred_check
      _
    $region63: #{tpu_custom_call.1} parent=1 // pred_check_branch
      %122 = sbr.rel (0) target = $region65
    $region64: #{tpu_custom_call.1} parent=1 // pred_region
      %123 = dma.done [#allocation12], 4096
    $region65: #{tpu_custom_call.1} parent=1 // pred_fallthru
      _
    // Predicated region
    $region66: #{tpu_custom_call.1} parent=1 // pred_check
      _
    $region67: #{tpu_custom_call.1} parent=1 // pred_check_branch
      %125 = sbr.rel (0) target = $region69
    $region68: #{tpu_custom_call.1} parent=1 // pred_region
      %126 = dma.done [#allocation12], 4096
    $region69: #{tpu_custom_call.1} parent=1 // pred_fallthru
      _
    %v127 = vld [vmem:[#allocation2] sm:$0xff]
    %v128 = vld [vmem:[#allocation5] sm:$0xff]
    %v129 = vld [vmem:[#allocation5 + $0x8] sm:$0xff]
    %v130 = vld [vmem:[#allocation5 + $0x10] sm:$0xff]
    %v131 = vld [vmem:[#allocation5 + $0x18] sm:$0xff]
    %v132 = vld [vmem:[#allocation5 + $0x20] sm:$0xff]
    %v133 = vld [vmem:[#allocation5 + $0x28] sm:$0xff]
    %v134 = vld [vmem:[#allocation5 + $0x30] sm:$0xff]
    %v135 = vld [vmem:[#allocation5 + $0x38] sm:$0xff]
    %v136 = vld [vmem:[#allocation5 + $0x40] sm:$0xff]
    %v137 = vld [vmem:[#allocation5 + $0x48] sm:$0xff]
    %v138 = vld [vmem:[#allocation5 + $0x50] sm:$0xff]
    %v139 = vld [vmem:[#allocation5 + $0x58] sm:$0xff]
    %v140 = vld [vmem:[#allocation7] sm:$0xf]
    %v142 = vlaneseq
    %v143 = vshrl.u32 %v142, 7
    %v144 = vsub.s32 0, %v143
    %v145 = vrot.slane %v140, %v144
    %v146 = vlaneseq
    %v147 = vshrl.u32 %v146, 7
    %v148 = vsub.s32 1, %v147
    %v149 = vrot.slane %v140, %v148
    %v150 = vlaneseq
    %v151 = vshrl.u32 %v150, 7
    %v152 = vsub.s32 2, %v151
    %v153 = vrot.slane %v140, %v152
    %v154 = vlaneseq
    %v155 = vshrl.u32 %v154, 7
    %v156 = vsub.s32 3, %v155
    %v157 = vrot.slane %v140, %v156
    %vm162 = vcmask 195584
    %v164 = vsel %vm162, %v127, 0
    %166 = vmatprep.subr.mxu0 0.0
    %167 = vmatpush1.msra.mxu0 0.0
    %168 = vmatprep.subr.mxu0 0.0
    %169 = vmatpush1.msra.mxu0 0.0
    %170 = vmatprep.subr.mxu0 0.0
    %171 = vmatpush1.msra.mxu0 0.0
    %172 = vmatprep.subr.mxu0 0.0
    %173 = vmatpush1.msra.mxu0 0.0
    %174 = vmatprep.subr.mxu0 0.0
    %175 = vmatpush1.msra.mxu0 0.0
    %176 = vmatprep.subr.mxu0 0.0
    %177 = vmatpush1.msra.mxu0 0.0
    %178 = vmatprep.subr.mxu0 0.0
    %179 = vmatpush1.msra.mxu0 0.0
    %180 = vmatprep.subr.mxu0 0.0
    %181 = vmatpush1.msra.mxu0 0.0
    %182 = vmatprep.subr.mxu0 0.0
    %183 = vmatpush1.msra.mxu0 0.0
    %184 = vmatprep.subr.mxu0 0.0
    %185 = vmatpush1.msra.mxu0 0.0
    %186 = vmatprep.subr.mxu0 0.0
    %187 = vmatpush1.msra.mxu0 0.0
    %188 = vmatprep.subr.mxu0 0.0
    %189 = vmatpush1.msra.mxu0 0.0
    %190 = vmatprep.subr.mxu0 0.0
    %191 = vmatpush1.msra.mxu0 0.0
    %192 = vmatprep.subr.mxu0 %v137
    %193 = vmatpush1.msra.mxu0 %v136
    %194 = vmatprep.subr.mxu0 %v133
    %195 = vmatpush1.msra.mxu0 %v132
    %196 = vmatprep.subr.mxu0 %v129
    %197 = vmatpush1.msra.mxu0 %v128
    %198 = vmatprep.subr.mxu0 0.0
    %199 = vmatpush2.msra.mxu0 0.0
    %200 = vmatprep.subr.mxu0 0.0
    %201 = vmatpush2.msra.mxu0 0.0
    %202 = vmatprep.subr.mxu0 0.0
    %203 = vmatpush2.msra.mxu0 0.0
    %204 = vmatprep.subr.mxu0 0.0
    %205 = vmatpush2.msra.mxu0 0.0
    %206 = vmatprep.subr.mxu0 0.0
    %207 = vmatpush2.msra.mxu0 0.0
    %208 = vmatprep.subr.mxu0 0.0
    %209 = vmatpush2.msra.mxu0 0.0
    %210 = vmatprep.subr.mxu0 0.0
    %211 = vmatpush2.msra.mxu0 0.0
    %212 = vmatprep.subr.mxu0 0.0
    %213 = vmatpush2.msra.mxu0 0.0
    %214 = vmatprep.subr.mxu0 0.0
    %215 = vmatpush2.msra.mxu0 0.0
    %216 = vmatprep.subr.mxu0 0.0
    %217 = vmatpush2.msra.mxu0 0.0
    %218 = vmatprep.subr.mxu0 0.0
    %219 = vmatpush2.msra.mxu0 0.0
    %220 = vmatprep.subr.mxu0 0.0
    %221 = vmatpush2.msra.mxu0 0.0
    %222 = vmatprep.subr.mxu0 0.0
    %223 = vmatpush2.msra.mxu0 0.0
    %224 = vmatprep.subr.mxu0 0.0
    %225 = vmatpush2.msra.mxu0 0.0
    %226 = vmatprep.subr.mxu0 0.0
    %227 = vmatpush2.msra.mxu0 0.0
    %228 = vmatprep.subr.mxu0 0.0
    %229 = vmatpush2.msra.mxu0 0.0
    %230 = vmatprep.mubr.f32.mxu0 0.0
    %231 = vmatmul.mubr.f32.gmra.mxu0 %v164
    %v232 = vpop.f32.mrf.mxu0
    %v233 = vadd.f32 %v145, %v232
    %v234 = vpop.f32.mrf.mxu0
    %v235 = vadd.f32 %v149, %v234
    %236 = vdwg.mxu0
    %237 = vmatprep.subr.mxu0 0.0
    %238 = vmatpush1.msra.mxu0 0.0
    %239 = vmatprep.subr.mxu0 0.0
    %240 = vmatpush1.msra.mxu0 0.0
    %241 = vmatprep.subr.mxu0 0.0
    %242 = vmatpush1.msra.mxu0 0.0
    %243 = vmatprep.subr.mxu0 0.0
    %244 = vmatpush1.msra.mxu0 0.0
    %245 = vmatprep.subr.mxu0 0.0
    %246 = vmatpush1.msra.mxu0 0.0
    %247 = vmatprep.subr.mxu0 0.0
    %248 = vmatpush1.msra.mxu0 0.0
    %249 = vmatprep.subr.mxu0 0.0
    %250 = vmatpush1.msra.mxu0 0.0
    %251 = vmatprep.subr.mxu0 0.0
    %252 = vmatpush1.msra.mxu0 0.0
    %253 = vmatprep.subr.mxu0 0.0
    %254 = vmatpush1.msra.mxu0 0.0
    %255 = vmatprep.subr.mxu0 0.0
    %256 = vmatpush1.msra.mxu0 0.0
    %257 = vmatprep.subr.mxu0 0.0
    %258 = vmatpush1.msra.mxu0 0.0
    %259 = vmatprep.subr.mxu0 0.0
    %260 = vmatpush1.msra.mxu0 0.0
    %261 = vmatprep.subr.mxu0 0.0
    %262 = vmatpush1.msra.mxu0 0.0
    %263 = vmatprep.subr.mxu0 %v139
    %264 = vmatpush1.msra.mxu0 %v138
    %265 = vmatprep.subr.mxu0 %v135
    %266 = vmatpush1.msra.mxu0 %v134
    %267 = vmatprep.subr.mxu0 %v131
    %268 = vmatpush1.msra.mxu0 %v130
    %269 = vmatprep.subr.mxu0 0.0
    %270 = vmatpush2.msra.mxu0 0.0
    %271 = vmatprep.subr.mxu0 0.0
    %272 = vmatpush2.msra.mxu0 0.0
    %273 = vmatprep.subr.mxu0 0.0
    %274 = vmatpush2.msra.mxu0 0.0
    %275 = vmatprep.subr.mxu0 0.0
    %276 = vmatpush2.msra.mxu0 0.0
    %277 = vmatprep.subr.mxu0 0.0
    %278 = vmatpush2.msra.mxu0 0.0
    %279 = vmatprep.subr.mxu0 0.0
    %280 = vmatpush2.msra.mxu0 0.0
    %281 = vmatprep.subr.mxu0 0.0
    %282 = vmatpush2.msra.mxu0 0.0
    %283 = vmatprep.subr.mxu0 0.0
    %284 = vmatpush2.msra.mxu0 0.0
    %285 = vmatprep.subr.mxu0 0.0
    %286 = vmatpush2.msra.mxu0 0.0
    %287 = vmatprep.subr.mxu0 0.0
    %288 = vmatpush2.msra.mxu0 0.0
    %289 = vmatprep.subr.mxu0 0.0
    %290 = vmatpush2.msra.mxu0 0.0
    %291 = vmatprep.subr.mxu0 0.0
    %292 = vmatpush2.msra.mxu0 0.0
    %293 = vmatprep.subr.mxu0 0.0
    %294 = vmatpush2.msra.mxu0 0.0
    %295 = vmatprep.subr.mxu0 0.0
    %296 = vmatpush2.msra.mxu0 0.0
    %297 = vmatprep.subr.mxu0 0.0
    %298 = vmatpush2.msra.mxu0 0.0
    %299 = vmatprep.subr.mxu0 0.0
    %300 = vmatpush2.msra.mxu0 0.0
    %301 = vmatprep.mubr.f32.mxu0 0.0
    %302 = vmatmul.mubr.f32.gmra.mxu0 %v164
    %v303 = vpop.f32.mrf.mxu0
    %v304 = vadd.f32 %v153, %v303
    %v305 = vpop.f32.mrf.mxu0
    %v306 = vadd.f32 %v157, %v305
    %307 = vdwg.mxu0
    %v308 = vmax.f32 %v233, 0.0
    %v309 = vmax.f32 %v235, 0.0
    %v310 = vmax.f32 %v304, 0.0
    %v311 = vmax.f32 %v306, 0.0
    %v312 = vld [vmem:[#allocation8] sm:$0xff]
    %v313 = vld [vmem:[#allocation8 + $0x8] sm:$0xff]
    %v314 = vld [vmem:[#allocation8 + $0x10] sm:$0xff]
    %v315 = vld [vmem:[#allocation8 + $0x18] sm:$0xff]
    %v316 = vld [vmem:[#allocation8 + $0x20] sm:$0xff]
    %v317 = vld [vmem:[#allocation8 + $0x28] sm:$0xff]
    %v318 = vld [vmem:[#allocation8 + $0x30] sm:$0xff]
    %v319 = vld [vmem:[#allocation8 + $0x38] sm:$0xff]
    %v320 = vld [vmem:[#allocation8 + $0x40] sm:$0xff]
    %v321 = vld [vmem:[#allocation8 + $0x48] sm:$0xff]
    %v322 = vld [vmem:[#allocation8 + $0x50] sm:$0xff]
    %v323 = vld [vmem:[#allocation8 + $0x58] sm:$0xff]
    %v324 = vld [vmem:[#allocation8 + $0x60] sm:$0xff]
    %v325 = vld [vmem:[#allocation8 + $0x68] sm:$0xff]
    %v326 = vld [vmem:[#allocation8 + $0x70] sm:$0xff]
    %v327 = vld [vmem:[#allocation8 + $0x78] sm:$0xff]
    %v328 = vld [vmem:[#allocation8 + $0x80] sm:$0xff]
    %v329 = vld [vmem:[#allocation8 + $0x88] sm:$0xff]
    %v330 = vld [vmem:[#allocation8 + $0x90] sm:$0xff]
    %v331 = vld [vmem:[#allocation8 + $0x98] sm:$0xff]
    %v332 = vld [vmem:[#allocation8 + $0xa0] sm:$0xff]
    %v333 = vld [vmem:[#allocation8 + $0xa8] sm:$0xff]
    %v334 = vld [vmem:[#allocation8 + $0xb0] sm:$0xff]
    %v335 = vld [vmem:[#allocation8 + $0xb8] sm:$0xff]
    %v336 = vld [vmem:[#allocation8 + $0xc0] sm:$0xff]
    %v337 = vld [vmem:[#allocation8 + $0xc8] sm:$0xff]
    %v338 = vld [vmem:[#allocation8 + $0xd0] sm:$0xff]
    %v339 = vld [vmem:[#allocation8 + $0xd8] sm:$0xff]
    %v340 = vld [vmem:[#allocation8 + $0xe0] sm:$0xff]
    %v341 = vld [vmem:[#allocation8 + $0xe8] sm:$0xff]
    %v342 = vld [vmem:[#allocation8 + $0xf0] sm:$0xff]
    %v343 = vld [vmem:[#allocation8 + $0xf8] sm:$0xff]
    %v344 = vld [vmem:[#allocation8 + $0x100] sm:$0xff]
    %v345 = vld [vmem:[#allocation8 + $0x108] sm:$0xff]
    %v346 = vld [vmem:[#allocation8 + $0x110] sm:$0xff]
    %v347 = vld [vmem:[#allocation8 + $0x118] sm:$0xff]
    %v348 = vld [vmem:[#allocation8 + $0x120] sm:$0xff]
    %v349 = vld [vmem:[#allocation8 + $0x128] sm:$0xff]
    %v350 = vld [vmem:[#allocation8 + $0x130] sm:$0xff]
    %v351 = vld [vmem:[#allocation8 + $0x138] sm:$0xff]
    %v352 = vld [vmem:[#allocation8 + $0x140] sm:$0xff]
    %v353 = vld [vmem:[#allocation8 + $0x148] sm:$0xff]
    %v354 = vld [vmem:[#allocation8 + $0x150] sm:$0xff]
    %v355 = vld [vmem:[#allocation8 + $0x158] sm:$0xff]
    %v356 = vld [vmem:[#allocation8 + $0x160] sm:$0xff]
    %v357 = vld [vmem:[#allocation8 + $0x168] sm:$0xff]
    %v358 = vld [vmem:[#allocation8 + $0x170] sm:$0xff]
    %v359 = vld [vmem:[#allocation8 + $0x178] sm:$0xff]
    %v360 = vld [vmem:[#allocation8 + $0x180] sm:$0xff]
    %v361 = vld [vmem:[#allocation8 + $0x188] sm:$0xff]
    %v362 = vld [vmem:[#allocation8 + $0x190] sm:$0xff]
    %v363 = vld [vmem:[#allocation8 + $0x198] sm:$0xff]
    %v364 = vld [vmem:[#allocation8 + $0x1a0] sm:$0xff]
    %v365 = vld [vmem:[#allocation8 + $0x1a8] sm:$0xff]
    %v366 = vld [vmem:[#allocation8 + $0x1b0] sm:$0xff]
    %v367 = vld [vmem:[#allocation8 + $0x1b8] sm:$0xff]
    %v368 = vld [vmem:[#allocation8 + $0x1c0] sm:$0xff]
    %v369 = vld [vmem:[#allocation8 + $0x1c8] sm:$0xff]
    %v370 = vld [vmem:[#allocation8 + $0x1d0] sm:$0xff]
    %v371 = vld [vmem:[#allocation8 + $0x1d8] sm:$0xff]
    %v372 = vld [vmem:[#allocation8 + $0x1e0] sm:$0xff]
    %v373 = vld [vmem:[#allocation8 + $0x1e8] sm:$0xff]
    %v374 = vld [vmem:[#allocation8 + $0x1f0] sm:$0xff]
    %v375 = vld [vmem:[#allocation8 + $0x1f8] sm:$0xff]
    %v376 = vld [vmem:[%s4] sm:$0x3]
    %v378 = vlaneseq
    %v379 = vshrl.u32 %v378, 7
    %v380 = vsub.s32 0, %v379
    %v381 = vrot.slane %v376, %v380
    %v382 = vlaneseq
    %v383 = vshrl.u32 %v382, 7
    %v384 = vsub.s32 1, %v383
    %v385 = vrot.slane %v376, %v384
    %388 = vmatprep.subr.mxu0 %v343
    %389 = vmatpush1.msra.mxu0 %v342
    %390 = vmatprep.subr.mxu0 %v341
    %391 = vmatpush1.msra.mxu0 %v340
    %392 = vmatprep.subr.mxu0 %v339
    %393 = vmatpush1.msra.mxu0 %v338
    %394 = vmatprep.subr.mxu0 %v337
    %395 = vmatpush1.msra.mxu0 %v336
    %396 = vmatprep.subr.mxu0 %v335
    %397 = vmatpush1.msra.mxu0 %v334
    %398 = vmatprep.subr.mxu0 %v333
    %399 = vmatpush1.msra.mxu0 %v332
    %400 = vmatprep.subr.mxu0 %v331
    %401 = vmatpush1.msra.mxu0 %v330
    %402 = vmatprep.subr.mxu0 %v329
    %403 = vmatpush1.msra.mxu0 %v328
    %404 = vmatprep.subr.mxu0 %v327
    %405 = vmatpush1.msra.mxu0 %v326
    %406 = vmatprep.subr.mxu0 %v325
    %407 = vmatpush1.msra.mxu0 %v324
    %408 = vmatprep.subr.mxu0 %v323
    %409 = vmatpush1.msra.mxu0 %v322
    %410 = vmatprep.subr.mxu0 %v321
    %411 = vmatpush1.msra.mxu0 %v320
    %412 = vmatprep.subr.mxu0 %v319
    %413 = vmatpush1.msra.mxu0 %v318
    %414 = vmatprep.subr.mxu0 %v317
    %415 = vmatpush1.msra.mxu0 %v316
    %416 = vmatprep.subr.mxu0 %v315
    %417 = vmatpush1.msra.mxu0 %v314
    %418 = vmatprep.subr.mxu0 %v313
    %419 = vmatpush1.msra.mxu0 %v312
    %420 = vmatprep.subr.mxu0 %v375
    %421 = vmatpush2.msra.mxu0 %v374
    %422 = vmatprep.subr.mxu0 %v373
    %423 = vmatpush2.msra.mxu0 %v372
    %424 = vmatprep.subr.mxu0 %v371
    %425 = vmatpush2.msra.mxu0 %v370
    %426 = vmatprep.subr.mxu0 %v369
    %427 = vmatpush2.msra.mxu0 %v368
    %428 = vmatprep.subr.mxu0 %v367
    %429 = vmatpush2.msra.mxu0 %v366
    %430 = vmatprep.subr.mxu0 %v365
    %431 = vmatpush2.msra.mxu0 %v364
    %432 = vmatprep.subr.mxu0 %v363
    %433 = vmatpush2.msra.mxu0 %v362
    %434 = vmatprep.subr.mxu0 %v361
    %435 = vmatpush2.msra.mxu0 %v360
    %436 = vmatprep.subr.mxu0 %v359
    %437 = vmatpush2.msra.mxu0 %v358
    %438 = vmatprep.subr.mxu0 %v357
    %439 = vmatpush2.msra.mxu0 %v356
    %440 = vmatprep.subr.mxu0 %v355
    %441 = vmatpush2.msra.mxu0 %v354
    %442 = vmatprep.subr.mxu0 %v353
    %443 = vmatpush2.msra.mxu0 %v352
    %444 = vmatprep.subr.mxu0 %v351
    %445 = vmatpush2.msra.mxu0 %v350
    %446 = vmatprep.subr.mxu0 %v349
    %447 = vmatpush2.msra.mxu0 %v348
    %448 = vmatprep.subr.mxu0 %v347
    %449 = vmatpush2.msra.mxu0 %v346
    %450 = vmatprep.subr.mxu0 %v345
    %451 = vmatpush2.msra.mxu0 %v344
    %452 = vmatprep.mubr.f32.mxu0 %v309
    %453 = vmatmul.mubr.f32.gmra.mxu0 %v308
    %v454 = vpop.f32.mrf.mxu0
    %v455 = vadd.f32 %v381, %v454
    %v456 = vpop.f32.mrf.mxu0
    %v457 = vadd.f32 %v385, %v456
    %458 = vdwg.mxu0
    %v459 = vmax.f32 %v455, 0.0
    %v460 = vmax.f32 %v457, 0.0
    %v461 = vld [vmem:[#allocation10] sm:$0xff]
    %v462 = vld [vmem:[#allocation10 + $0x8] sm:$0xff]
    %v463 = vld [vmem:[#allocation10 + $0x10] sm:$0xff]
    %v464 = vld [vmem:[#allocation10 + $0x18] sm:$0xff]
    %v465 = vld [vmem:[#allocation10 + $0x20] sm:$0xff]
    %v466 = vld [vmem:[#allocation10 + $0x28] sm:$0xff]
    %v467 = vld [vmem:[#allocation10 + $0x30] sm:$0xff]
    %v468 = vld [vmem:[#allocation10 + $0x38] sm:$0xff]
    %v469 = vld [vmem:[#allocation10 + $0x40] sm:$0xff]
    %v470 = vld [vmem:[#allocation10 + $0x48] sm:$0xff]
    %v471 = vld [vmem:[#allocation10 + $0x50] sm:$0xff]
    %v472 = vld [vmem:[#allocation10 + $0x58] sm:$0xff]
    %v473 = vld [vmem:[#allocation10 + $0x60] sm:$0xff]
    %v474 = vld [vmem:[#allocation10 + $0x68] sm:$0xff]
    %v475 = vld [vmem:[#allocation10 + $0x70] sm:$0xff]
    %v476 = vld [vmem:[#allocation10 + $0x78] sm:$0xff]
    %v477 = vld [vmem:[#allocation10 + $0x80] sm:$0xff]
    %v478 = vld [vmem:[#allocation10 + $0x88] sm:$0xff]
    %v479 = vld [vmem:[#allocation10 + $0x90] sm:$0xff]
    %v480 = vld [vmem:[#allocation10 + $0x98] sm:$0xff]
    %v481 = vld [vmem:[#allocation10 + $0xa0] sm:$0xff]
    %v482 = vld [vmem:[#allocation10 + $0xa8] sm:$0xff]
    %v483 = vld [vmem:[#allocation10 + $0xb0] sm:$0xff]
    %v484 = vld [vmem:[#allocation10 + $0xb8] sm:$0xff]
    %v485 = vld [vmem:[#allocation10 + $0xc0] sm:$0xff]
    %v486 = vld [vmem:[#allocation10 + $0xc8] sm:$0xff]
    %v487 = vld [vmem:[#allocation10 + $0xd0] sm:$0xff]
    %v488 = vld [vmem:[#allocation10 + $0xd8] sm:$0xff]
    %v489 = vld [vmem:[#allocation10 + $0xe0] sm:$0xff]
    %v490 = vld [vmem:[#allocation10 + $0xe8] sm:$0xff]
    %v491 = vld [vmem:[#allocation10 + $0xf0] sm:$0xff]
    %v492 = vld [vmem:[#allocation10 + $0xf8] sm:$0xff]
    %v493 = vld [vmem:[#allocation10 + $0x100] sm:$0xff]
    %v494 = vld [vmem:[#allocation10 + $0x108] sm:$0xff]
    %v495 = vld [vmem:[#allocation10 + $0x110] sm:$0xff]
    %v496 = vld [vmem:[#allocation10 + $0x118] sm:$0xff]
    %v497 = vld [vmem:[#allocation10 + $0x120] sm:$0xff]
    %v498 = vld [vmem:[#allocation10 + $0x128] sm:$0xff]
    %v499 = vld [vmem:[#allocation10 + $0x130] sm:$0xff]
    %v500 = vld [vmem:[#allocation10 + $0x138] sm:$0xff]
    %v501 = vld [vmem:[#allocation10 + $0x140] sm:$0xff]
    %v502 = vld [vmem:[#allocation10 + $0x148] sm:$0xff]
    %v503 = vld [vmem:[#allocation10 + $0x150] sm:$0xff]
    %v504 = vld [vmem:[#allocation10 + $0x158] sm:$0xff]
    %v505 = vld [vmem:[#allocation10 + $0x160] sm:$0xff]
    %v506 = vld [vmem:[#allocation10 + $0x168] sm:$0xff]
    %v507 = vld [vmem:[#allocation10 + $0x170] sm:$0xff]
    %v508 = vld [vmem:[#allocation10 + $0x178] sm:$0xff]
    %v509 = vld [vmem:[#allocation10 + $0x180] sm:$0xff]
    %v510 = vld [vmem:[#allocation10 + $0x188] sm:$0xff]
    %v511 = vld [vmem:[#allocation10 + $0x190] sm:$0xff]
    %v512 = vld [vmem:[#allocation10 + $0x198] sm:$0xff]
    %v513 = vld [vmem:[#allocation10 + $0x1a0] sm:$0xff]
    %v514 = vld [vmem:[#allocation10 + $0x1a8] sm:$0xff]
    %v515 = vld [vmem:[#allocation10 + $0x1b0] sm:$0xff]
    %v516 = vld [vmem:[#allocation10 + $0x1b8] sm:$0xff]
    %v517 = vld [vmem:[#allocation10 + $0x1c0] sm:$0xff]
    %v518 = vld [vmem:[#allocation10 + $0x1c8] sm:$0xff]
    %v519 = vld [vmem:[#allocation10 + $0x1d0] sm:$0xff]
    %v520 = vld [vmem:[#allocation10 + $0x1d8] sm:$0xff]
    %v521 = vld [vmem:[#allocation10 + $0x1e0] sm:$0xff]
    %v522 = vld [vmem:[#allocation10 + $0x1e8] sm:$0xff]
    %v523 = vld [vmem:[#allocation10 + $0x1f0] sm:$0xff]
    %v524 = vld [vmem:[#allocation10 + $0x1f8] sm:$0xff]
    %v525 = vld [vmem:[%s6] sm:$0x3]
    %v527 = vlaneseq
    %v528 = vshrl.u32 %v527, 7
    %v529 = vsub.s32 0, %v528
    %v530 = vrot.slane %v525, %v529
    %v531 = vlaneseq
    %v532 = vshrl.u32 %v531, 7
    %v533 = vsub.s32 1, %v532
    %v534 = vrot.slane %v525, %v533
    %537 = vmatprep.subr.mxu0 %v492
    %538 = vmatpush1.msra.mxu0 %v491
    %539 = vmatprep.subr.mxu0 %v490
    %540 = vmatpush1.msra.mxu0 %v489
    %541 = vmatprep.subr.mxu0 %v488
    %542 = vmatpush1.msra.mxu0 %v487
    %543 = vmatprep.subr.mxu0 %v486
    %544 = vmatpush1.msra.mxu0 %v485
    %545 = vmatprep.subr.mxu0 %v484
    %546 = vmatpush1.msra.mxu0 %v483
    %547 = vmatprep.subr.mxu0 %v482
    %548 = vmatpush1.msra.mxu0 %v481
    %549 = vmatprep.subr.mxu0 %v480
    %550 = vmatpush1.msra.mxu0 %v479
    %551 = vmatprep.subr.mxu0 %v478
    %552 = vmatpush1.msra.mxu0 %v477
    %553 = vmatprep.subr.mxu0 %v476
    %554 = vmatpush1.msra.mxu0 %v475
    %555 = vmatprep.subr.mxu0 %v474
    %556 = vmatpush1.msra.mxu0 %v473
    %557 = vmatprep.subr.mxu0 %v472
    %558 = vmatpush1.msra.mxu0 %v471
    %559 = vmatprep.subr.mxu0 %v470
    %560 = vmatpush1.msra.mxu0 %v469
    %561 = vmatprep.subr.mxu0 %v468
    %562 = vmatpush1.msra.mxu0 %v467
    %563 = vmatprep.subr.mxu0 %v466
    %564 = vmatpush1.msra.mxu0 %v465
    %565 = vmatprep.subr.mxu0 %v464
    %566 = vmatpush1.msra.mxu0 %v463
    %567 = vmatprep.subr.mxu0 %v462
    %568 = vmatpush1.msra.mxu0 %v461
    %569 = vmatprep.subr.mxu0 %v524
    %570 = vmatpush2.msra.mxu0 %v523
    %571 = vmatprep.subr.mxu0 %v522
    %572 = vmatpush2.msra.mxu0 %v521
    %573 = vmatprep.subr.mxu0 %v520
    %574 = vmatpush2.msra.mxu0 %v519
    %575 = vmatprep.subr.mxu0 %v518
    %576 = vmatpush2.msra.mxu0 %v517
    %577 = vmatprep.subr.mxu0 %v516
    %578 = vmatpush2.msra.mxu0 %v515
    %579 = vmatprep.subr.mxu0 %v514
    %580 = vmatpush2.msra.mxu0 %v513
    %581 = vmatprep.subr.mxu0 %v512
    %582 = vmatpush2.msra.mxu0 %v511
    %583 = vmatprep.subr.mxu0 %v510
    %584 = vmatpush2.msra.mxu0 %v509
    %585 = vmatprep.subr.mxu0 %v508
    %586 = vmatpush2.msra.mxu0 %v507
    %587 = vmatprep.subr.mxu0 %v506
    %588 = vmatpush2.msra.mxu0 %v505
    %589 = vmatprep.subr.mxu0 %v504
    %590 = vmatpush2.msra.mxu0 %v503
    %591 = vmatprep.subr.mxu0 %v502
    %592 = vmatpush2.msra.mxu0 %v501
    %593 = vmatprep.subr.mxu0 %v500
    %594 = vmatpush2.msra.mxu0 %v499
    %595 = vmatprep.subr.mxu0 %v498
    %596 = vmatpush2.msra.mxu0 %v497
    %597 = vmatprep.subr.mxu0 %v496
    %598 = vmatpush2.msra.mxu0 %v495
    %599 = vmatprep.subr.mxu0 %v494
    %600 = vmatpush2.msra.mxu0 %v493
    %601 = vmatprep.mubr.f32.mxu0 %v311
    %602 = vmatmul.mubr.f32.gmra.mxu0 %v310
    %v603 = vpop.f32.mrf.mxu0
    %v604 = vadd.f32 %v530, %v603
    %v605 = vpop.f32.mrf.mxu0
    %v606 = vadd.f32 %v534, %v605
    %607 = vdwg.mxu0
    %v608 = vmax.f32 %v604, 0.0
    %v609 = vmax.f32 %v606, 0.0
    %v610 = vld [vmem:[#allocation11] sm:$0xff]
    %v611 = vld [vmem:[#allocation11 + $0x8] sm:$0xff]
    %v612 = vld [vmem:[#allocation11 + $0x10] sm:$0xff]
    %v613 = vld [vmem:[#allocation11 + $0x18] sm:$0xff]
    %v614 = vld [vmem:[#allocation11 + $0x20] sm:$0xff]
    %v615 = vld [vmem:[#allocation11 + $0x28] sm:$0xff]
    %v616 = vld [vmem:[#allocation11 + $0x30] sm:$0xff]
    %v617 = vld [vmem:[#allocation11 + $0x38] sm:$0xff]
    %v618 = vld [vmem:[#allocation11 + $0x40] sm:$0xff]
    %v619 = vld [vmem:[#allocation11 + $0x48] sm:$0xff]
    %v620 = vld [vmem:[#allocation11 + $0x50] sm:$0xff]
    %v621 = vld [vmem:[#allocation11 + $0x58] sm:$0xff]
    %v622 = vld [vmem:[#allocation11 + $0x60] sm:$0xff]
    %v623 = vld [vmem:[#allocation11 + $0x68] sm:$0xff]
    %v624 = vld [vmem:[#allocation11 + $0x70] sm:$0xff]
    %v625 = vld [vmem:[#allocation11 + $0x78] sm:$0xff]
    %v626 = vld [vmem:[#allocation11 + $0x80] sm:$0xff]
    %v627 = vld [vmem:[#allocation11 + $0x88] sm:$0xff]
    %v628 = vld [vmem:[#allocation11 + $0x90] sm:$0xff]
    %v629 = vld [vmem:[#allocation11 + $0x98] sm:$0xff]
    %v630 = vld [vmem:[#allocation11 + $0xa0] sm:$0xff]
    %v631 = vld [vmem:[#allocation11 + $0xa8] sm:$0xff]
    %v632 = vld [vmem:[#allocation11 + $0xb0] sm:$0xff]
    %v633 = vld [vmem:[#allocation11 + $0xb8] sm:$0xff]
    %v634 = vld [vmem:[#allocation11 + $0xc0] sm:$0xff]
    %v635 = vld [vmem:[#allocation11 + $0xc8] sm:$0xff]
    %v636 = vld [vmem:[#allocation11 + $0xd0] sm:$0xff]
    %v637 = vld [vmem:[#allocation11 + $0xd8] sm:$0xff]
    %v638 = vld [vmem:[#allocation11 + $0xe0] sm:$0xff]
    %v639 = vld [vmem:[#allocation11 + $0xe8] sm:$0xff]
    %v640 = vld [vmem:[#allocation11 + $0xf0] sm:$0xff]
    %v641 = vld [vmem:[#allocation11 + $0xf8] sm:$0xff]
    %v642 = vld [vmem:[#allocation13] sm:$0xff]
    %v643 = vld [vmem:[#allocation13 + $0x8] sm:$0xff]
    %v644 = vld [vmem:[#allocation13 + $0x10] sm:$0xff]
    %v645 = vld [vmem:[#allocation13 + $0x18] sm:$0xff]
    %v646 = vld [vmem:[#allocation13 + $0x20] sm:$0xff]
    %v647 = vld [vmem:[#allocation13 + $0x28] sm:$0xff]
    %v648 = vld [vmem:[#allocation13 + $0x30] sm:$0xff]
    %v649 = vld [vmem:[#allocation13 + $0x38] sm:$0xff]
    %v650 = vld [vmem:[#allocation13 + $0x40] sm:$0xff]
    %v651 = vld [vmem:[#allocation13 + $0x48] sm:$0xff]
    %v652 = vld [vmem:[#allocation13 + $0x50] sm:$0xff]
    %v653 = vld [vmem:[#allocation13 + $0x58] sm:$0xff]
    %v654 = vld [vmem:[#allocation13 + $0x60] sm:$0xff]
    %v655 = vld [vmem:[#allocation13 + $0x68] sm:$0xff]
    %v656 = vld [vmem:[#allocation13 + $0x70] sm:$0xff]
    %v657 = vld [vmem:[#allocation13 + $0x78] sm:$0xff]
    %v658 = vld [vmem:[#allocation13 + $0x80] sm:$0xff]
    %v659 = vld [vmem:[#allocation13 + $0x88] sm:$0xff]
    %v660 = vld [vmem:[#allocation13 + $0x90] sm:$0xff]
    %v661 = vld [vmem:[#allocation13 + $0x98] sm:$0xff]
    %v662 = vld [vmem:[#allocation13 + $0xa0] sm:$0xff]
    %v663 = vld [vmem:[#allocation13 + $0xa8] sm:$0xff]
    %v664 = vld [vmem:[#allocation13 + $0xb0] sm:$0xff]
    %v665 = vld [vmem:[#allocation13 + $0xb8] sm:$0xff]
    %v666 = vld [vmem:[#allocation13 + $0xc0] sm:$0xff]
    %v667 = vld [vmem:[#allocation13 + $0xc8] sm:$0xff]
    %v668 = vld [vmem:[#allocation13 + $0xd0] sm:$0xff]
    %v669 = vld [vmem:[#allocation13 + $0xd8] sm:$0xff]
    %v670 = vld [vmem:[#allocation13 + $0xe0] sm:$0xff]
    %v671 = vld [vmem:[#allocation13 + $0xe8] sm:$0xff]
    %v672 = vld [vmem:[#allocation13 + $0xf0] sm:$0xff]
    %v673 = vld [vmem:[#allocation13 + $0xf8] sm:$0xff]
    %674 = vmatprep.subr.mxu0 0.0
    %675 = vmatpush1.msra.mxu0 %v657
    %676 = vmatprep.subr.mxu0 0.0
    %677 = vmatpush1.msra.mxu0 %v656
    %678 = vmatprep.subr.mxu0 0.0
    %679 = vmatpush1.msra.mxu0 %v655
    %680 = vmatprep.subr.mxu0 0.0
    %681 = vmatpush1.msra.mxu0 %v654
    %682 = vmatprep.subr.mxu0 0.0
    %683 = vmatpush1.msra.mxu0 %v653
    %684 = vmatprep.subr.mxu0 0.0
    %685 = vmatpush1.msra.mxu0 %v652
    %686 = vmatprep.subr.mxu0 0.0
    %687 = vmatpush1.msra.mxu0 %v651
    %688 = vmatprep.subr.mxu0 0.0
    %689 = vmatpush1.msra.mxu0 %v650
    %690 = vmatprep.subr.mxu0 0.0
    %691 = vmatpush1.msra.mxu0 %v649
    %692 = vmatprep.subr.mxu0 0.0
    %693 = vmatpush1.msra.mxu0 %v648
    %694 = vmatprep.subr.mxu0 0.0
    %695 = vmatpush1.msra.mxu0 %v647
    %696 = vmatprep.subr.mxu0 0.0
    %697 = vmatpush1.msra.mxu0 %v646
    %698 = vmatprep.subr.mxu0 0.0
    %699 = vmatpush1.msra.mxu0 %v645
    %700 = vmatprep.subr.mxu0 0.0
    %701 = vmatpush1.msra.mxu0 %v644
    %702 = vmatprep.subr.mxu0 0.0
    %703 = vmatpush1.msra.mxu0 %v643
    %704 = vmatprep.subr.mxu0 0.0
    %705 = vmatpush1.msra.mxu0 %v642
    %706 = vmatprep.subr.mxu0 0.0
    %707 = vmatpush2.msra.mxu0 %v673
    %708 = vmatprep.subr.mxu0 0.0
    %709 = vmatpush2.msra.mxu0 %v672
    %710 = vmatprep.subr.mxu0 0.0
    %711 = vmatpush2.msra.mxu0 %v671
    %712 = vmatprep.subr.mxu0 0.0
    %713 = vmatpush2.msra.mxu0 %v670
    %714 = vmatprep.subr.mxu0 0.0
    %715 = vmatpush2.msra.mxu0 %v669
    %716 = vmatprep.subr.mxu0 0.0
    %717 = vmatpush2.msra.mxu0 %v668
    %718 = vmatprep.subr.mxu0 0.0
    %719 = vmatpush2.msra.mxu0 %v667
    %720 = vmatprep.subr.mxu0 0.0
    %721 = vmatpush2.msra.mxu0 %v666
    %722 = vmatprep.subr.mxu0 0.0
    %723 = vmatpush2.msra.mxu0 %v665
    %724 = vmatprep.subr.mxu0 0.0
    %725 = vmatpush2.msra.mxu0 %v664
    %726 = vmatprep.subr.mxu0 0.0
    %727 = vmatpush2.msra.mxu0 %v663
    %728 = vmatprep.subr.mxu0 0.0
    %729 = vmatpush2.msra.mxu0 %v662
    %730 = vmatprep.subr.mxu0 0.0
    %731 = vmatpush2.msra.mxu0 %v661
    %732 = vmatprep.subr.mxu0 0.0
    %733 = vmatpush2.msra.mxu0 %v660
    %734 = vmatprep.subr.mxu0 0.0
    %735 = vmatpush2.msra.mxu0 %v659
    %736 = vmatprep.subr.mxu0 0.0
    %737 = vmatpush2.msra.mxu0 %v658
    %738 = vmatprep.mubr.f32.mxu0 %v609
    %739 = vmatmul.mubr.f32.gmra.mxu0 %v608
    %v740 = vpop.f32.mrf.mxu0
    %v741 = vadd.f32 0.0, %v740
    %v742 = vpop.f32.mrf.mxu0
    %743 = vdwg.mxu0
    %744 = vmatprep.subr.mxu0 0.0
    %745 = vmatpush1.msra.mxu0 %v625
    %746 = vmatprep.subr.mxu0 0.0
    %747 = vmatpush1.msra.mxu0 %v624
    %748 = vmatprep.subr.mxu0 0.0
    %749 = vmatpush1.msra.mxu0 %v623
    %750 = vmatprep.subr.mxu0 0.0
    %751 = vmatpush1.msra.mxu0 %v622
    %752 = vmatprep.subr.mxu0 0.0
    %753 = vmatpush1.msra.mxu0 %v621
    %754 = vmatprep.subr.mxu0 0.0
    %755 = vmatpush1.msra.mxu0 %v620
    %756 = vmatprep.subr.mxu0 0.0
    %757 = vmatpush1.msra.mxu0 %v619
    %758 = vmatprep.subr.mxu0 0.0
    %759 = vmatpush1.msra.mxu0 %v618
    %760 = vmatprep.subr.mxu0 0.0
    %761 = vmatpush1.msra.mxu0 %v617
    %762 = vmatprep.subr.mxu0 0.0
    %763 = vmatpush1.msra.mxu0 %v616
    %764 = vmatprep.subr.mxu0 0.0
    %765 = vmatpush1.msra.mxu0 %v615
    %766 = vmatprep.subr.mxu0 0.0
    %767 = vmatpush1.msra.mxu0 %v614
    %768 = vmatprep.subr.mxu0 0.0
    %769 = vmatpush1.msra.mxu0 %v613
    %770 = vmatprep.subr.mxu0 0.0
    %771 = vmatpush1.msra.mxu0 %v612
    %772 = vmatprep.subr.mxu0 0.0
    %773 = vmatpush1.msra.mxu0 %v611
    %774 = vmatprep.subr.mxu0 0.0
    %775 = vmatpush1.msra.mxu0 %v610
    %776 = vmatprep.subr.mxu0 0.0
    %777 = vmatpush2.msra.mxu0 %v641
    %778 = vmatprep.subr.mxu0 0.0
    %779 = vmatpush2.msra.mxu0 %v640
    %780 = vmatprep.subr.mxu0 0.0
    %781 = vmatpush2.msra.mxu0 %v639
    %782 = vmatprep.subr.mxu0 0.0
    %783 = vmatpush2.msra.mxu0 %v638
    %784 = vmatprep.subr.mxu0 0.0
    %785 = vmatpush2.msra.mxu0 %v637
    %786 = vmatprep.subr.mxu0 0.0
    %787 = vmatpush2.msra.mxu0 %v636
    %788 = vmatprep.subr.mxu0 0.0
    %789 = vmatpush2.msra.mxu0 %v635
    %790 = vmatprep.subr.mxu0 0.0
    %791 = vmatpush2.msra.mxu0 %v634
    %792 = vmatprep.subr.mxu0 0.0
    %793 = vmatpush2.msra.mxu0 %v633
    %794 = vmatprep.subr.mxu0 0.0
    %795 = vmatpush2.msra.mxu0 %v632
    %796 = vmatprep.subr.mxu0 0.0
    %797 = vmatpush2.msra.mxu0 %v631
    %798 = vmatprep.subr.mxu0 0.0
    %799 = vmatpush2.msra.mxu0 %v630
    %800 = vmatprep.subr.mxu0 0.0
    %801 = vmatpush2.msra.mxu0 %v629
    %802 = vmatprep.subr.mxu0 0.0
    %803 = vmatpush2.msra.mxu0 %v628
    %804 = vmatprep.subr.mxu0 0.0
    %805 = vmatpush2.msra.mxu0 %v627
    %806 = vmatprep.subr.mxu0 0.0
    %807 = vmatpush2.msra.mxu0 %v626
    %808 = vmatprep.mubr.f32.mxu0 %v460
    %809 = vmatmul.mubr.f32.gmra.mxu0 %v459
    %v810 = vpop.f32.mrf.mxu0
    %v811 = vadd.f32 %v741, %v810
    %v812 = vpop.f32.mrf.mxu0
    %813 = vdwg.mxu0
    %v814 = vld [vmem:[%s9] sm:$0x1]
    %v816 = vlaneseq
    %v817 = vshrl.u32 %v816, 7
    %v818 = vsub.s32 0, %v817
    %v819 = vrot.slane %v814, %v818
    %v821 = vadd.f32 %v811, %v819
    %822 = vst [vmem:[#allocation14] sm:$0xff] %v821
    // Predicated region
    $region70: #{tpu_custom_call.1} parent=1 // pred_check
      _
    $region71: #{tpu_custom_call.1} parent=1 // pred_check_branch
      %824 = sbr.rel (0) target = $region73
    $region72: #{tpu_custom_call.1} parent=1 // pred_region
      %s826 = ssub.s32 128, 128
      %827 = vsyncadd [#allocation4], %s826
      %s829 = sshll.u32 [#allocation14], 4
      %s830 = int_to_ptr.vmem [resolvable:$true] %s829
      %832 = dma.vmem_to_hbm [thread:$0]  %s830, 128, %s10, [#allocation4]
    $region73: #{tpu_custom_call.1} parent=1 // pred_fallthru
      _
    // Predicated region
    $region74: #{tpu_custom_call.1} parent=1 // pred_check
      _
    $region75: #{tpu_custom_call.1} parent=1 // pred_check_branch
      %834 = sbr.rel (0) target = $region77
    $region76: #{tpu_custom_call.1} parent=1 // pred_region
      %835 = dma.done [#allocation4], 128
    $region77: #{tpu_custom_call.1} parent=1 // pred_fallthru
      _
    %836 = vsyncpa [#allocation3], 1
    %837 = vsyncpa [#allocation6], 1
    %838 = vsyncpa [#allocation9], 1
    %839 = vsyncpa [#allocation12], 1
    %840 = vsyncpa [#allocation4], 1

</llo_original>
